<compile_context>
chip_gen: v7x
topology: tpu7x:2x2x1
jax: 0.10.0
libtpu: 0.0.40
codegen_flags: <defaults>
</compile_context>

<pallas_src>
import numpy as np
import jax
import jax.numpy as jnp
from jax.experimental import pallas as pl
from jax.experimental.pallas import tpu as pltpu


_LANE_TILE_CAP = 4096          # max lanes per grid step (multiple of 128)
_TILE_BYTES_TARGET = 1 << 20   # ~1 MiB per input tile (keeps VMEM temporaries well in budget)


def _ceil_div(a, b):
  return -(-a // b)


# --------------------------------------------------------------------------------------
# Pallas kernel
# --------------------------------------------------------------------------------------
def _make_bfp_prime_shared_kernel(block_size, sub_block_size, m_bits, max_shift,
                                  rounding_mode):
  if rounding_mode not in ('round_to_nearest', 'round_even'):
    raise ValueError(f'unsupported rounding_mode: {rounding_mode}')
  n_sub = block_size // sub_block_size
  qmax = float((1 << m_bits) - 1)

  def kernel(x_ref, o_ref):
    x = x_ref[...].astype(jnp.float32)                 # (GB, block_size, TP)
    shape = x.shape
    u = pltpu.bitcast(x, jnp.uint32)
    exp = jnp.bitwise_and(jnp.right_shift(u, 23), jnp.uint32(0xFF)).astype(jnp.int32)
    is_special = exp == 255                            # Inf / NaN -> pass through
    exp_m = jnp.where(is_special, 0, exp)

    # Shared (block) exponent: max over the within-block (sublane) axis -> XLU.
    shared_exp = jnp.max(exp_m, axis=1, keepdims=True)           # (GB, 1, TP)
    floor_exp = shared_exp - max_shift

    def sub_bexp(lo):
      # Biased exponent of the sub-block scale.  Using
      #   shared - min(shared - sub, max_shift) == max(sub, shared - max_shift).
      sub_exp = jnp.max(exp_m[:, lo:lo + sub_block_size, :], axis=1, keepdims=True)
      return jnp.maximum(sub_exp, floor_exp) - (m_bits - 1)      # (GB, 1, TP) int32

    # Expand the per-sub-block exponent to a dense full-tile array (no sliced stores).
    bexp = jnp.broadcast_to(sub_bexp(0), shape)
    if n_sub > 1:
      row = jax.lax.broadcasted_iota(jnp.int32, shape, 1)
      for s in range(1, n_sub):
        lo = s * sub_block_size
        bexp = jnp.where(row >= lo, sub_bexp(lo), bexp)

    # Power-of-two scale and its exact inverse assembled from exponent bits (no EUP, no div).
    tiny = bexp < 1                                    # scale would be subnormal -> result 0
    bexp_c = jnp.clip(bexp, 1, 254)
    scale = pltpu.bitcast(jnp.left_shift(bexp_c, 23), jnp.float32)
    inv_scale = pltpu.bitcast(jnp.left_shift(254 - bexp_c, 23), jnp.float32)
    # TODO(synk): inv_scale degenerates to 0 when bexp_c == 254 (only reachable for
    #             m_bits == 1 blocks whose shared exponent is 254).
    max_v = scale * jnp.float32(qmax)

    t = x * inv_scale
    if rounding_mode == 'round_even':
      r = jnp.round(t)                                 # half to even
    else:
      # half away from zero: floor(|t| + 0.5), then restore the sign bit.
      sign_bits = jnp.bitwise_and(pltpu.bitcast(t, jnp.uint32), jnp.uint32(0x80000000))
      r_abs = jnp.floor(jnp.abs(t) + jnp.float32(0.5))
      r = pltpu.bitcast(jnp.bitwise_or(pltpu.bitcast(r_abs, jnp.uint32), sign_bits),
                        jnp.float32)

    q = jnp.clip(r * scale, -max_v, max_v)
    q = jnp.where(tiny, jnp.float32(0.0), q)
    q = jnp.where(is_special, x, q)
    o_ref[...] = q.astype(o_ref.dtype)                 # single dense store

  return kernel


# --------------------------------------------------------------------------------------
# Tiling heuristics
# --------------------------------------------------------------------------------------
def _choose_tiles(G, block_size, P, itemsize):
  # Lane (last-dim) tile: a multiple of 128 when possible, else the full (small) dim.
  if P < 128:
    tp = P
  else:
    lane_cap = max(128, min(
        _LANE_TILE_CAP,
        ((2 * _TILE_BYTES_TARGET) // (block_size * itemsize)) // 128 * 128))
    tp = min(lane_cap, (P // 128) * 128)
  grid_p = _ceil_div(P, tp)

  # Group several independent blocks per grid step to reach ~1 MiB tiles.
  slice_bytes = block_size * tp * itemsize
  gb = max(1, min(G, _TILE_BYTES_TARGET // max(1, slice_bytes)))
  grid_g = _ceil_div(G, gb)

  # Keep a handful of grid steps so the "parallel" axes can shard across TensorCores.
  if grid_g * grid_p < 8 and G > 1:
    want_g = min(G, _ceil_div(8, grid_p))
    gb = _ceil_div(G, want_g)
    grid_g = _ceil_div(G, gb)
  return gb, tp, grid_g, grid_p


# --------------------------------------------------------------------------------------
# Glue: axis handling, block layout, pallas_call
# --------------------------------------------------------------------------------------
def quantize_to_bfp_prime_shared(x, bitwidth, block_size, sub_block_size,
                                 sub_block_shift_bits, axis,
                                 rounding_mode='round_to_nearest'):
  assert block_size % sub_block_size == 0
  m_bits = bitwidth - 9
  assert m_bits >= 1, 'bitwidth must include 1 sign + 8 exponent bits'
  max_shift = (1 << sub_block_shift_bits) - 1

  orig_dtype = x.dtype
  if x.dtype == jnp.float32 or x.dtype == jnp.bfloat16:
    io_dtype = x.dtype              # keep HBM I/O in the native width
  else:
    io_dtype = jnp.float32
  xq = x.astype(io_dtype)

  shape = x.shape
  ndim = x.ndim
  ax = axis % ndim
  pre = int(np.prod(shape[:ax], dtype=np.int64)) if ax > 0 else 1
  L = shape[ax]
  post = int(np.prod(shape[ax + 1:], dtype=np.int64)) if ax < ndim - 1 else 1

  Lp = _ceil_div(L, block_size) * block_size
  nb = Lp // block_size

  if post >= 32:
    # Transpose-free layout (pure reshapes): within-block elements -> sublanes,
    # trailing positions -> lanes.
    x3 = xq.reshape(pre, L, post)
    if Lp != L:
      x3 = jnp.pad(x3, ((0, 0), (0, Lp - L), (0, 0)))
    x4 = x3.reshape(pre * nb, block_size, post)
    G, P = pre * nb, post
    transposed = False
  else:
    # TODO(synk): trailing-axis / tiny-post case still pays an XLA transpose to put the
    #             independent blocks on the lane axis.
    xm = jnp.moveaxis(xq, ax, -1)
    flat = xm.reshape(pre * post, L)
    if Lp != L:
      flat = jnp.pad(flat, ((0, 0), (0, Lp - L)))
    NB = pre * post * nb
    x4 = flat.reshape(NB, block_size).T.reshape(1, block_size, NB)
    G, P = 1, NB
    transposed = True

  itemsize = np.dtype(io_dtype).itemsize
  GB, TP, grid_g, grid_p = _choose_tiles(G, block_size, P, itemsize)

  kernel = _make_bfp_prime_shared_kernel(block_size, sub_block_size, m_bits,
                                         max_shift, rounding_mode)

  out4 = pl.pallas_call(
      kernel,
      out_shape=jax.ShapeDtypeStruct((G, block_size, P), io_dtype),
      grid=(grid_g, grid_p),
      in_specs=[pl.BlockSpec((GB, block_size, TP), lambda g, p: (g, 0, p))],
      out_specs=pl.BlockSpec((GB, block_size, TP), lambda g, p: (g, 0, p)),
      compiler_params=pltpu.CompilerParams(
          dimension_semantics=("parallel", "parallel")),
  )(x4)

  if transposed:
    xm_shape = tuple(d for i, d in enumerate(shape) if i != ax) + (L,)
    y_flat = out4.reshape(block_size, P).T.reshape(pre * post, Lp)[:, :L]
    y = jnp.moveaxis(y_flat.reshape(xm_shape), -1, ax)
  else:
    y = out4.reshape(pre, Lp, post)[:, :L, :].reshape(shape)
  return y.astype(orig_dtype)


# --------------------------------------------------------------------------------------
# Module-like wrapper mirroring the PyTorch class (no learnable parameters)
# --------------------------------------------------------------------------------------
class BFPPrimeSharedQuantizer:
  def __init__(self, bitwidth, block_size, sub_block_size, sub_block_shift_bits,
               axis, rounding_mode='round_to_nearest'):
    self.bitwidth = bitwidth
    self.block_size = block_size
    self.sub_block_size = sub_block_size
    self.sub_block_shift_bits = sub_block_shift_bits
    self.axis = axis
    self.rounding_mode = rounding_mode

  def __call__(self, x):
    return quantize_to_bfp_prime_shared(x, self.bitwidth, self.block_size,
                                        self.sub_block_size,
                                        self.sub_block_shift_bits, self.axis,
                                        self.rounding_mode)


# --------------------------------------------------------------------------------------
# Pure-JAX reference (same math, no Pallas) for a correctness check
# --------------------------------------------------------------------------------------
def _reference(x, bitwidth, block_size, sub_block_size, sub_block_shift_bits, axis,
               rounding_mode='round_to_nearest'):
  m_bits = bitwidth - 9
  max_shift = (1 << sub_block_shift_bits) - 1
  n_sub = block_size // sub_block_size

  ax = axis % x.ndim
  xf = x.astype(jnp.float32)
  xm = jnp.moveaxis(xf, ax, -1)
  L = xm.shape[-1]
  Lp = _ceil_div(L, block_size) * block_size
  if Lp != L:
    xm = jnp.pad(xm, [(0, 0)] * (xm.ndim - 1) + [(0, Lp - L)])
  R = int(np.prod(xm.shape[:-1]))
  b = xm.reshape(R, Lp // block_size, n_sub, sub_block_size)

  u = jax.lax.bitcast_convert_type(b, jnp.uint32)
  exp = jnp.bitwise_and(jnp.right_shift(u, 23), jnp.uint32(0xFF)).astype(jnp.int32)
  is_special = exp == 255
  exp_m = jnp.where(is_special, 0, exp)
  shared = jnp.max(exp_m, axis=(2, 3), keepdims=True)
  sub = jnp.max(exp_m, axis=3, keepdims=True)
  bexp = jnp.maximum(sub, shared - max_shift) - (m_bits - 1)
  tiny = bexp < 1
  bexp_c = jnp.clip(bexp, 1, 254)
  scale = jax.lax.bitcast_convert_type(jnp.left_shift(bexp_c, 23), jnp.float32)
  inv_scale = jax.lax.bitcast_convert_type(jnp.left_shift(254 - bexp_c, 23), jnp.float32)
  max_v = scale * jnp.float32((1 << m_bits) - 1)

  t = b * inv_scale
  if rounding_mode == 'round_even':
    r = jnp.round(t)
  else:
    r = jnp.sign(t) * jnp.floor(jnp.abs(t) + 0.5)
  q = jnp.clip(r * scale, -max_v, max_v)
  q = jnp.where(tiny, 0.0, q)
  q = jnp.where(is_special, b, q)

  y = q.reshape(R, Lp).reshape(xm.shape)[..., :L]
  return jnp.moveaxis(y, -1, ax).astype(x.dtype)


# --------------------------------------------------------------------------------------
if __name__ == "__main__":
  key = jax.random.PRNGKey(0)

  # Case 1: NCHW activation, quantization along the channel axis (axis=1),
  # round-to-nearest (half away from zero).  Exercises the transpose-free layout.
  x1 = jax.random.normal(key, (2, 16, 8, 8), dtype=jnp.float32)
  x1 = x1.at[0, :, 0, 0].set(0.0)          # all-zero block (tiny-scale guard)
  x1 = x1.at[1, :, 3, 3].multiply(1.0e4)   # large-magnitude site

  q1 = BFPPrimeSharedQuantizer(bitwidth=13, block_size=8, sub_block_size=2,
                               sub_block_shift_bits=1, axis=1,
                               rounding_mode='round_to_nearest')
  y1 = jax.block_until_ready(q1(x1))
  y1_ref = jax.block_until_ready(
      _reference(x1, 13, 8, 2, 1, axis=1, rounding_mode='round_to_nearest'))
  assert y1.shape == x1.shape and y1.dtype == x1.dtype
  np.testing.assert_allclose(np.asarray(y1), np.asarray(y1_ref), rtol=1e-6, atol=1e-7)

  # Case 2: trailing-axis quantization, round-half-to-even.  Exercises the transposed path.
  key2 = jax.random.PRNGKey(0)
  x2 = jax.random.normal(key2, (2, 8, 32), dtype=jnp.float32) * 3.0
  q2 = BFPPrimeSharedQuantizer(bitwidth=16, block_size=8, sub_block_size=4,
                               sub_block_shift_bits=2, axis=-1,
                               rounding_mode='round_even')
  y2 = jax.block_until_ready(q2(x2))
  y2_ref = jax.block_until_ready(
      _reference(x2, 16, 8, 4, 2, axis=-1, rounding_mode='round_even'))
  assert y2.shape == x2.shape and y2.dtype == x2.dtype
  np.testing.assert_allclose(np.asarray(y2), np.asarray(y2_ref), rtol=1e-6, atol=1e-7)

  print("KERNEL_OK")
</pallas_src>

<mosaic_0001>
module attributes {stable_mosaic.version = 11 : i64} {
  func.func @kernel(%arg0: i32, %arg1: i32, %arg2: memref<1x8x64xf32, #tpu.memory_space<vmem>>, %arg3: memref<1x8x64xf32, #tpu.memory_space<vmem>>) attributes {dimension_semantics = [#tpu.dimension_semantics<parallel>, #tpu.dimension_semantics<parallel>], iteration_bounds = array<i64: 4, 1>, scalar_prefetch = 0 : i64, scratch_operands = 0 : i64, tpu.core_type = #tpu.core_type<tc>, window_params = [{transform_indices = @transform_0, window_bounds = array<i64: 1, 8, 64>}, {transform_indices = @transform_1, window_bounds = array<i64: 1, 8, 64>}]} {
    %c0 = arith.constant 0 : index
    %c0_0 = arith.constant 0 : index
    %c0_1 = arith.constant 0 : index
    %0 = vector.load %arg2[%c0, %c0_0, %c0_1] : memref<1x8x64xf32, #tpu.memory_space<vmem>>, vector<1x8x64xf32>
    %1 = tpu.bitcast %0 : vector<1x8x64xf32> -> vector<1x8x64xi32>
    %c23_i32 = arith.constant 23 : i32
    %2 = vector.broadcast %c23_i32 : i32 to vector<1x8x64xi32>
    %3 = arith.shrui %1, %2 : vector<1x8x64xi32>
    %c255_i32 = arith.constant 255 : i32
    %4 = vector.broadcast %c255_i32 : i32 to vector<1x8x64xi32>
    %5 = arith.andi %3, %4 : vector<1x8x64xi32>
    %c255_i32_2 = arith.constant 255 : i32
    %6 = vector.broadcast %c255_i32_2 : i32 to vector<1x8x64xi32>
    %7 = arith.cmpi eq, %5, %6 : vector<1x8x64xi32>
    %c0_i32 = arith.constant 0 : i32
    %8 = vector.broadcast %c0_i32 : i32 to vector<1x8x64xi32>
    %9 = arith.select %7, %8, %5 : vector<1x8x64xi1>, vector<1x8x64xi32>
    %cst = arith.constant dense<-2147483648> : vector<1x64xi32>
    %10 = vector.multi_reduction <maxsi>, %9, %cst [1] : vector<1x8x64xi32> to vector<1x64xi32>
    %11 = vector.shape_cast %10 : vector<1x64xi32> to vector<1x1x64xi32>
    %c1_i32 = arith.constant 1 : i32
    %12 = vector.broadcast %c1_i32 : i32 to vector<1x1x64xi32>
    %13 = arith.subi %11, %12 : vector<1x1x64xi32>
    %14 = vector.extract_strided_slice %9 {offsets = [0, 0, 0], sizes = [1, 2, 64], strides = [1, 1, 1]} : vector<1x8x64xi32> to vector<1x2x64xi32>
    %cst_3 = arith.constant dense<-2147483648> : vector<1x64xi32>
    %15 = vector.multi_reduction <maxsi>, %14, %cst_3 [1] : vector<1x2x64xi32> to vector<1x64xi32>
    %16 = vector.shape_cast %15 : vector<1x64xi32> to vector<1x1x64xi32>
    %17 = arith.maxsi %16, %13 : vector<1x1x64xi32>
    %c3_i32 = arith.constant 3 : i32
    %18 = vector.broadcast %c3_i32 : i32 to vector<1x1x64xi32>
    %19 = arith.subi %17, %18 : vector<1x1x64xi32>
    %20 = vector.shape_cast %19 : vector<1x1x64xi32> to vector<1x1x64xi32>
    %21 = vector.broadcast %20 : vector<1x1x64xi32> to vector<1x8x64xi32>
    %22 = tpu.iota {dimensions = array<i32: 1>} : vector<1x8x64xi32>
    %c2_i32 = arith.constant 2 : i32
    %23 = vector.broadcast %c2_i32 : i32 to vector<1x8x64xi32>
    %24 = arith.cmpi sge, %22, %23 : vector<1x8x64xi32>
    %25 = vector.extract_strided_slice %9 {offsets = [0, 2, 0], sizes = [1, 2, 64], strides = [1, 1, 1]} : vector<1x8x64xi32> to vector<1x2x64xi32>
    %cst_4 = arith.constant dense<-2147483648> : vector<1x64xi32>
    %26 = vector.multi_reduction <maxsi>, %25, %cst_4 [1] : vector<1x2x64xi32> to vector<1x64xi32>
    %27 = vector.shape_cast %26 : vector<1x64xi32> to vector<1x1x64xi32>
    %28 = arith.maxsi %27, %13 : vector<1x1x64xi32>
    %c3_i32_5 = arith.constant 3 : i32
    %29 = vector.broadcast %c3_i32_5 : i32 to vector<1x1x64xi32>
    %30 = arith.subi %28, %29 : vector<1x1x64xi32>
    %31 = vector.shape_cast %30 : vector<1x1x64xi32> to vector<1x1x64xi32>
    %32 = vector.broadcast %31 : vector<1x1x64xi32> to vector<1x8x64xi32>
    %33 = arith.select %24, %32, %21 : vector<1x8x64xi1>, vector<1x8x64xi32>
    %c4_i32 = arith.constant 4 : i32
    %34 = vector.broadcast %c4_i32 : i32 to vector<1x8x64xi32>
    %35 = arith.cmpi sge, %22, %34 : vector<1x8x64xi32>
    %36 = vector.extract_strided_slice %9 {offsets = [0, 4, 0], sizes = [1, 2, 64], strides = [1, 1, 1]} : vector<1x8x64xi32> to vector<1x2x64xi32>
    %cst_6 = arith.constant dense<-2147483648> : vector<1x64xi32>
    %37 = vector.multi_reduction <maxsi>, %36, %cst_6 [1] : vector<1x2x64xi32> to vector<1x64xi32>
    %38 = vector.shape_cast %37 : vector<1x64xi32> to vector<1x1x64xi32>
    %39 = arith.maxsi %38, %13 : vector<1x1x64xi32>
    %c3_i32_7 = arith.constant 3 : i32
    %40 = vector.broadcast %c3_i32_7 : i32 to vector<1x1x64xi32>
    %41 = arith.subi %39, %40 : vector<1x1x64xi32>
    %42 = vector.shape_cast %41 : vector<1x1x64xi32> to vector<1x1x64xi32>
    %43 = vector.broadcast %42 : vector<1x1x64xi32> to vector<1x8x64xi32>
    %44 = arith.select %35, %43, %33 : vector<1x8x64xi1>, vector<1x8x64xi32>
    %c6_i32 = arith.constant 6 : i32
    %45 = vector.broadcast %c6_i32 : i32 to vector<1x8x64xi32>
    %46 = arith.cmpi sge, %22, %45 : vector<1x8x64xi32>
    %47 = vector.extract_strided_slice %9 {offsets = [0, 6, 0], sizes = [1, 2, 64], strides = [1, 1, 1]} : vector<1x8x64xi32> to vector<1x2x64xi32>
    %cst_8 = arith.constant dense<-2147483648> : vector<1x64xi32>
    %48 = vector.multi_reduction <maxsi>, %47, %cst_8 [1] : vector<1x2x64xi32> to vector<1x64xi32>
    %49 = vector.shape_cast %48 : vector<1x64xi32> to vector<1x1x64xi32>
    %50 = arith.maxsi %49, %13 : vector<1x1x64xi32>
    %c3_i32_9 = arith.constant 3 : i32
    %51 = vector.broadcast %c3_i32_9 : i32 to vector<1x1x64xi32>
    %52 = arith.subi %50, %51 : vector<1x1x64xi32>
    %53 = vector.shape_cast %52 : vector<1x1x64xi32> to vector<1x1x64xi32>
    %54 = vector.broadcast %53 : vector<1x1x64xi32> to vector<1x8x64xi32>
    %55 = arith.select %46, %54, %44 : vector<1x8x64xi1>, vector<1x8x64xi32>
    %c1_i32_10 = arith.constant 1 : i32
    %56 = vector.broadcast %c1_i32_10 : i32 to vector<1x8x64xi32>
    %57 = arith.cmpi slt, %55, %56 : vector<1x8x64xi32>
    %c1_i32_11 = arith.constant 1 : i32
    %c254_i32 = arith.constant 254 : i32
    %58 = vector.broadcast %c1_i32_11 : i32 to vector<1x8x64xi32>
    %59 = arith.maxsi %58, %55 : vector<1x8x64xi32>
    %60 = vector.broadcast %c254_i32 : i32 to vector<1x8x64xi32>
    %61 = arith.minsi %60, %59 : vector<1x8x64xi32>
    %c23_i32_12 = arith.constant 23 : i32
    %62 = vector.broadcast %c23_i32_12 : i32 to vector<1x8x64xi32>
    %63 = arith.shli %61, %62 : vector<1x8x64xi32>
    %64 = tpu.bitcast %63 : vector<1x8x64xi32> -> vector<1x8x64xf32>
    %c254_i32_13 = arith.constant 254 : i32
    %65 = vector.broadcast %c254_i32_13 : i32 to vector<1x8x64xi32>
    %66 = arith.subi %65, %61 : vector<1x8x64xi32>
    %c23_i32_14 = arith.constant 23 : i32
    %67 = vector.broadcast %c23_i32_14 : i32 to vector<1x8x64xi32>
    %68 = arith.shli %66, %67 : vector<1x8x64xi32>
    %69 = tpu.bitcast %68 : vector<1x8x64xi32> -> vector<1x8x64xf32>
    %cst_15 = arith.constant 1.500000e+01 : f32
    %70 = vector.broadcast %cst_15 : f32 to vector<1x8x64xf32>
    %71 = arith.mulf %64, %70 : vector<1x8x64xf32>
    %72 = arith.mulf %0, %69 : vector<1x8x64xf32>
    %73 = tpu.bitcast %72 : vector<1x8x64xf32> -> vector<1x8x64xi32>
    %c-2147483648_i32 = arith.constant -2147483648 : i32
    %74 = vector.broadcast %c-2147483648_i32 : i32 to vector<1x8x64xi32>
    %75 = arith.andi %73, %74 : vector<1x8x64xi32>
    %76 = math.absf %72 : vector<1x8x64xf32>
    %cst_16 = arith.constant 5.000000e-01 : f32
    %77 = vector.broadcast %cst_16 : f32 to vector<1x8x64xf32>
    %78 = arith.addf %76, %77 : vector<1x8x64xf32>
    %79 = math.floor %78 : vector<1x8x64xf32>
    %80 = tpu.bitcast %79 : vector<1x8x64xf32> -> vector<1x8x64xi32>
    %81 = arith.ori %80, %75 : vector<1x8x64xi32>
    %82 = tpu.bitcast %81 : vector<1x8x64xi32> -> vector<1x8x64xf32>
    %83 = arith.mulf %82, %64 : vector<1x8x64xf32>
    %cst_17 = arith.constant 0.000000e+00 : f32
    %84 = vector.broadcast %cst_17 : f32 to vector<1x8x64xf32>
    %85 = arith.subf %84, %71 : vector<1x8x64xf32>
    %86 = arith.maximumf %85, %83 : vector<1x8x64xf32>
    %87 = arith.minimumf %71, %86 : vector<1x8x64xf32>
    %cst_18 = arith.constant 0.000000e+00 : f32
    %88 = vector.broadcast %cst_18 : f32 to vector<1x8x64xf32>
    %89 = arith.select %57, %88, %87 : vector<1x8x64xi1>, vector<1x8x64xf32>
    %90 = arith.select %7, %0, %89 : vector<1x8x64xi1>, vector<1x8x64xf32>
    %c0_19 = arith.constant 0 : index
    %c0_20 = arith.constant 0 : index
    %c0_21 = arith.constant 0 : index
    %91 = vector.load %arg3[%c0_19, %c0_20, %c0_21] : memref<1x8x64xf32, #tpu.memory_space<vmem>>, vector<1x8x64xf32>
    tpu.vector_store %arg3[%c0_19, %c0_20, %c0_21], %90 {strides = array<i32>} : memref<1x8x64xf32, #tpu.memory_space<vmem>>, vector<1x8x64xf32>,
    return
  }
  func.func @transform_0(%arg0: i32, %arg1: i32) -> (i32, i32, i32) {
    %c0_i32 = arith.constant 0 : i32
    %c0_i32_0 = arith.constant 0 : i32
    return %arg0, %c0_i32, %arg1 : i32, i32, i32
  }
  func.func @transform_1(%arg0: i32, %arg1: i32) -> (i32, i32, i32) {
    %c0_i32 = arith.constant 0 : i32
    %c0_i32_0 = arith.constant 0 : i32
    return %arg0, %c0_i32, %arg1 : i32, i32, i32
  }
}

</mosaic_0001>

<llo_original>
// kernel: tpu_custom_call.1
$region0: #{tpu_custom_call.1}
  #allocation0 [shape = 'u32[]', space=smem, size = 0x4, offset = 0x4, fixed_abs, tag = 'smem constant byte address 0x4 - core index']
  #allocation1 [shape = 'u32[144,128]{1,0:T(1,128)}', space=vmem, size = 0x12000, scoped, tag = 'internal scratch']
  %s0 = inlined_call_operand.hbm [shape: f32[4,8,64], index: 0, kind: input, shape index: {}]
  %s1 = inlined_call_operand.hbm [shape: f32[4,8,64], index: 1, kind: output, shape index: {}]
  %s2 = sld [smem:[#allocation0]]
  $region41: #{tpu_custom_call.1} parent=0
    _
  %s4 = ssub.s32 1, %s2
  %s5 = scalar_select 0, %s4, %s2
  $region1: #{tpu_custom_call.1} parent=0
    #allocation2 [shape = 'u8[8192]{0}', space=vmem, size = 0x2000, scoped, tag = 'input window, operand 0']
    #allocation3 [shape = 's32[2]{0}', space=sflag, size = 0x8, scoped, tag = 'scoped memory for tpu_custom_call.1']
    #allocation4 [shape = 's32[2]{0}', space=sflag, size = 0x8, scoped, tag = 'scoped memory for tpu_custom_call.1']
    #allocation5 [shape = 'u8[8192]{0}', space=vmem, size = 0x2000, scoped, tag = 'output window, operand 0']
    %6 = vsyncpa [#allocation3], 0
    %s7 = scalar_lea.sflag [#allocation3], 1
    %8 = vsyncpa %s7, 0
    %9 = vsyncpa [#allocation4], 0
    %s10 = scalar_lea.sflag [#allocation4], 1
    %11 = vsyncpa %s10, 0
    loop: start=0, step=1, limit=6
    $region2: #{tpu_custom_call.1} parent=1 // loop_pre_header
      _
    $region3: #{tpu_custom_call.1} parent=1 // loop_header
      %s13 = sphi 0, %s17
      %p14 = scmp.ge.s32.totalorder %s13, 6
      %s20 = sphi 0, %s32
      %s21 = sphi 0, %s28
      %s22 = sphi 0, %s20
      %s23 = sphi 0, %s21
      %s24 = sphi 0, %s22
      %s25 = sphi 0, %s23
      %s37 = sphi 0, %s39
      %s40 = sphi 0, %s37
      %s41 = sphi 0, %s40
      %s57 = sphi 0, %s41
      %s65 = sphi 0, %s67
      %s68 = sphi 0, %s65
      %s69 = sphi 0, %s68
      %s85 = sphi 0, %s69
    $region4: #{tpu_custom_call.1} parent=1 // loop_header_branch
      %16 = sbr.rel (%p14) target = $region8
    $region5: #{tpu_custom_call.1} parent=1 // loop_body
      %s18 = ssub.s32 %s13, 1
      %s19 = ssub.s32 %s13, 2
      %s26 = sadd.s32 1, %s21
      %p27 = scmp.ge.s32.totalorder %s26, 1
      %s28 = scalar_select %p27, 0, %s26
      %s29 = sadd.s32 1, %s20
      %s30 = scalar_select %p27, %s29, %s20
      %p31 = scmp.ge.s32.totalorder %s30, 4
      %s32 = scalar_select %p31, 0, %s30
      %s33 = ssub.s32 %s20, %s32
      %s34 = ssub.s32 %s21, %s28
      %s35 = sor.u32 %s33, %s34
      %p36 = scmp.eq.s32.totalorder %s35, 0
      %s38 = sadd.s32 %s37, 1
      %s39 = scalar_select %p36, %s37, %s38
      %p42 = pneg %p36
      %p43 = scmp.eq.s32.totalorder %s13, 3
      %p44 = por %p42, %p43
      %p45 = scmp.ne.s32.totalorder %s37, %s40
      %p46 = scmp.eq.s32.totalorder %s13, 0
      %p47 = por %p45, %p46
      %p48 = scmp.ne.s32.totalorder %s37, %s40
      %p49 = scmp.eq.s32.totalorder %s18, 3
      %p50 = por %p48, %p49
      %p51 = scmp.ne.s32.totalorder %s40, %s41
      %p52 = scmp.eq.s32.totalorder %s18, 0
      %p53 = por %p51, %p52
      %p54 = scmp.ne.s32.totalorder %s40, %s41
      %p55 = scmp.eq.s32.totalorder %s19, 3
      %p56 = por %p54, %p55
      %p58 = scmp.ne.s32.totalorder %s41, %s57
      %p59 = scmp.eq.s32.totalorder %s19, 0
      %p60 = por %p58, %p59
      %s61 = ssub.s32 %s20, %s32
      %s62 = ssub.s32 %s21, %s28
      %s63 = sor.u32 %s61, %s62
      %p64 = scmp.eq.s32.totalorder %s63, 0
      %s66 = sadd.s32 %s65, 1
      %s67 = scalar_select %p64, %s65, %s66
      %p70 = pneg %p64
      %p71 = scmp.eq.s32.totalorder %s13, 3
      %p72 = por %p70, %p71
      %p73 = scmp.ne.s32.totalorder %s65, %s68
      %p74 = scmp.eq.s32.totalorder %s13, 0
      %p75 = por %p73, %p74
      %p76 = scmp.ne.s32.totalorder %s65, %s68
      %p77 = scmp.eq.s32.totalorder %s18, 3
      %p78 = por %p76, %p77
      %p79 = scmp.ne.s32.totalorder %s68, %s69
      %p80 = scmp.eq.s32.totalorder %s18, 0
      %p81 = por %p79, %p80
      %p82 = scmp.ne.s32.totalorder %s68, %s69
      %p83 = scmp.eq.s32.totalorder %s19, 3
      %p84 = por %p82, %p83
      %p86 = scmp.ne.s32.totalorder %s69, %s85
      %p87 = scmp.eq.s32.totalorder %s19, 0
      %p88 = por %p86, %p87
      %p89 = scmp.le.s32.totalorder 1, %s13
      %p90 = scmp.lt.s32.totalorder %s13, 5
      %p91 = pnand %p89, %p90
      %p92 = pneg %p91
      // Predicated region
      $region9: #{tpu_custom_call.1} parent=5 // pred_check
        _
      $region10: #{tpu_custom_call.1} parent=5 // pred_check_branch
        %94 = sbr.rel (%p91) target = $region12
      $region11: #{tpu_custom_call.1} parent=5 // pred_region
        %s95 = ssub.s32 %s13, 1
      $region12: #{tpu_custom_call.1} parent=5 // pred_fallthru
        _
      %p96 = scmp.lt.s32.totalorder %s13, 4
      // Predicated region
      $region13: #{tpu_custom_call.1} parent=5 // pred_check
        %p97 = pneg %p96
      $region14: #{tpu_custom_call.1} parent=5 // pred_check_branch
        %99 = sbr.rel (%p97) target = $region16
      $region15: #{tpu_custom_call.1} parent=5 // pred_region
        // Predicated region
        $region17: #{tpu_custom_call.1} parent=15 // pred_check
          %p100 = pneg %p47
        $region18: #{tpu_custom_call.1} parent=15 // pred_check_branch
          %102 = sbr.rel (%p100) target = $region20
        $region19: #{tpu_custom_call.1} parent=15 // pred_region
          %s103 = sand.u32 %s37, 1
          %s104 = scalar_lea.sflag [#allocation3], %s103
          %s105 = sand.u32 %s37, 1
          %s106 = smul.addr %s105, 8
          %s107 = scalar_lea.vmem [#allocation2], %s106
          %s109 = ssub.s32 128, 128
          %110 = vsyncadd %s104, %s109
          %s111 = sadd.s32 %s21, %s20
          %s112 = smul.addr %s111, 128
          %s113 = scalar_lea.hbm %s0, %s112
          %s115 = sshll.u32 %s107, 4
          %s116 = int_to_ptr.vmem [resolvable:$true] %s115
          %118 = dma.hbm_to_vmem [thread:$0]  %s113, 128, %s116, %s104
        $region20: #{tpu_custom_call.1} parent=15 // pred_fallthru
          _
      $region16: #{tpu_custom_call.1} parent=5 // pred_fallthru
        _
      %p119 = scmp.le.s32.totalorder 1, %s13
      %p120 = scmp.lt.s32.totalorder %s13, 5
      %p121 = pnand %p119, %p120
      %p122 = pneg %p121
      // Predicated region
      $region21: #{tpu_custom_call.1} parent=5 // pred_check
        _
      $region22: #{tpu_custom_call.1} parent=5 // pred_check_branch
        %124 = sbr.rel (%p121) target = $region24
      $region23: #{tpu_custom_call.1} parent=5 // pred_region
        %s125 = ssub.s32 %s13, 1
        %s126 = sand.u32 %s40, 1
        %s127 = scalar_lea.sflag [#allocation3], %s126
        %s128 = sand.u32 %s40, 1
        %s129 = smul.addr %s128, 8
        %s130 = scalar_lea.vmem [#allocation2], %s129
        // Predicated region
        $region25: #{tpu_custom_call.1} parent=23 // pred_check
          %p131 = pneg %p53
        $region26: #{tpu_custom_call.1} parent=23 // pred_check_branch
          %133 = sbr.rel (%p131) target = $region28
        $region27: #{tpu_custom_call.1} parent=23 // pred_region
          %134 = dma.done %s127, 128
        $region28: #{tpu_custom_call.1} parent=23 // pred_fallthru
          _
        %s135 = sand.u32 %s40, 1
        %s136 = scalar_lea.sflag [#allocation3], %s135
        %s137 = sand.u32 %s40, 1
        %s138 = smul.addr %s137, 8
        %s139 = scalar_lea.vmem [#allocation2], %s138
        %p140 = pneg %p53
        %p141 = pneg %p50
        %p142 = pneg %p81
        %p143 = pneg %p78
        %s144 = sand.u32 %s68, 1
        %s145 = scalar_lea.sflag [#allocation4], %s144
        %s146 = sand.u32 %s68, 1
        %s147 = smul.addr %s146, 8
        %s148 = scalar_lea.vmem [#allocation5], %s147
        %v149 = vld [vmem:[%s130] sm:$0xff]
        %v151 = vshrl.u32 %v149, 23
        %v152 = vand.u32 %v151, 255
        %vm153 = vcmp.eq.s32.totalorder %v152, 255
        %v154 = vsel %vm153, 0, %v152
        %vm155 = vcmask 523264
        %v156 = vsel %vm155, %v154, 2147483648
        %v157 = vrot.slane %v156, 4
        %vm158 = vcmp.gt.s32.totalorder %v156, %v157
        %v159 = vsel %vm158, %v156, %v157
        %v160 = vrot.slane %v159, 2
        %vm161 = vcmp.gt.s32.totalorder %v159, %v160
        %v162 = vsel %vm161, %v159, %v160
        %v163 = vrot.slane %v162, 1
        %vm164 = vcmp.gt.s32.totalorder %v162, %v163
        %v165 = vsel %vm164, %v162, %v163
        %v166 = vsub.s32 %v165, 1
        %vm167 = vcmask 517120
        %v168 = vsel %vm167, %v154, 2147483648
        %v169 = vrot.slane %v168, 4
        %vm170 = vcmp.gt.s32.totalorder %v168, %v169
        %v171 = vsel %vm170, %v168, %v169
        %v172 = vrot.slane %v171, 2
        %vm173 = vcmp.gt.s32.totalorder %v171, %v172
        %v174 = vsel %vm173, %v171, %v172
        %v175 = vrot.slane %v174, 1
        %vm176 = vcmp.gt.s32.totalorder %v174, %v175
        %v177 = vsel %vm176, %v174, %v175
        %vm178 = vcmp.gt.s32.totalorder %v177, %v166
        %v179 = vsel %vm178, %v177, %v166
        %v180 = vsub.s32 %v179, 3
        %v181 = vlaneseq
        %v182 = vshrl.u32 %v181, 7
        %vm183 = vcmp.ge.s32.totalorder %v182, 2
        %vm184 = vcmask 519170
        %v185 = vsel %vm184, %v154, 2147483648
        %v186 = vrot.slane %v185, 4
        %vm187 = vcmp.gt.s32.totalorder %v185, %v186
        %v188 = vsel %vm187, %v185, %v186
        %v189 = vrot.slane %v188, 2
        %vm190 = vcmp.gt.s32.totalorder %v188, %v189
        %v191 = vsel %vm190, %v188, %v189
        %v192 = vrot.slane %v191, 1
        %vm193 = vcmp.gt.s32.totalorder %v191, %v192
        %v194 = vsel %vm193, %v191, %v192
        %vm195 = vcmp.gt.s32.totalorder %v194, %v166
        %v196 = vsel %vm195, %v194, %v166
        %v197 = vsub.s32 %v196, 3
        %v198 = vsel %vm183, %v197, %v180
        %vm199 = vcmp.ge.s32.totalorder %v182, 4
        %vm200 = vcmask 521220
        %v201 = vsel %vm200, %v154, 2147483648
        %v202 = vrot.slane %v201, 4
        %vm203 = vcmp.gt.s32.totalorder %v201, %v202
        %v204 = vsel %vm203, %v201, %v202
        %v205 = vrot.slane %v204, 2
        %vm206 = vcmp.gt.s32.totalorder %v204, %v205
        %v207 = vsel %vm206, %v204, %v205
        %v208 = vrot.slane %v207, 1
        %vm209 = vcmp.gt.s32.totalorder %v207, %v208
        %v210 = vsel %vm209, %v207, %v208
        %vm211 = vcmp.gt.s32.totalorder %v210, %v166
        %v212 = vsel %vm211, %v210, %v166
        %v213 = vsub.s32 %v212, 3
        %v214 = vsel %vm199, %v213, %v198
        %vm215 = vcmp.ge.s32.totalorder %v182, 6
        %vm216 = vcmask 523270
        %v217 = vsel %vm216, %v154, 2147483648
        %v218 = vrot.slane %v217, 4
        %vm219 = vcmp.gt.s32.totalorder %v217, %v218
        %v220 = vsel %vm219, %v217, %v218
        %v221 = vrot.slane %v220, 2
        %vm222 = vcmp.gt.s32.totalorder %v220, %v221
        %v223 = vsel %vm222, %v220, %v221
        %v224 = vrot.slane %v223, 1
        %vm225 = vcmp.gt.s32.totalorder %v223, %v224
        %v226 = vsel %vm225, %v223, %v224
        %vm227 = vcmp.gt.s32.totalorder %v226, %v166
        %v228 = vsel %vm227, %v226, %v166
        %v229 = vsub.s32 %v228, 3
        %v230 = vsel %vm215, %v229, %v214
        %vm231 = vcmp.lt.s32.totalorder %v230, 1
        %vm232 = vcmp.gt.s32.totalorder %v230, 1
        %v233 = vsel %vm232, %v230, 1
        %vm234 = vcmp.lt.s32.totalorder %v233, 254
        %v235 = vsel %vm234, %v233, 254
        %v236 = vshll.u32 %v235, 23
        %v238 = vsub.s32 254, %v235
        %v239 = vshll.u32 %v238, 23
        %v241 = vmul.f32 %v236, 15.0
        %v242 = vmul.f32 %v149, %v239
        %v244 = vand.u32 %v242, 2147483648
        %v245 = vand.u32 2147483647, %v242
        %v246 = vadd.f32 %v245, 0.5
        %v247 = vfloor.f32 %v246
        %v249 = vor.u32 %v247, %v244
        %v251 = vmul.f32 %v249, %v236
        %v252 = vsub.f32 0.0, %v241
        %v253 = vmax.f32 %v252, %v251
        %v254 = vmin.f32 %v241, %v253
        %v255 = vsel %vm231, 0.0, %v254
        %v256 = vsel %vm153, %v149, %v255
        %257 = vst.msk [vmem:[%s148] sm:$0xff] %vm155, %v256
        %s258 = sand.u32 %s68, 1
        %s259 = scalar_lea.sflag [#allocation4], %s258
        %s260 = sand.u32 %s68, 1
        %s261 = smul.addr %s260, 8
        %s262 = scalar_lea.vmem [#allocation5], %s261
        // Predicated region
        $region29: #{tpu_custom_call.1} parent=23 // pred_check
          %p263 = pneg %p78
        $region30: #{tpu_custom_call.1} parent=23 // pred_check_branch
          %265 = sbr.rel (%p263) target = $region32
        $region31: #{tpu_custom_call.1} parent=23 // pred_region
          %s267 = ssub.s32 128, 128
          %268 = vsyncadd %s259, %s267
          %s269 = sadd.s32 %s23, %s22
          %s270 = smul.addr %s269, 128
          %s271 = scalar_lea.hbm %s1, %s270
          %s273 = sshll.u32 %s262, 4
          %s274 = int_to_ptr.vmem [resolvable:$true] %s273
          %276 = dma.vmem_to_hbm [thread:$0]  %s274, 128, %s271, %s259
        $region32: #{tpu_custom_call.1} parent=23 // pred_fallthru
          _
      $region24: #{tpu_custom_call.1} parent=5 // pred_fallthru
        _
      %p277 = scmp.le.s32.totalorder 2, %s13
      // Predicated region
      $region33: #{tpu_custom_call.1} parent=5 // pred_check
        %p278 = pneg %p277
      $region34: #{tpu_custom_call.1} parent=5 // pred_check_branch
        %280 = sbr.rel (%p278) target = $region36
      $region35: #{tpu_custom_call.1} parent=5 // pred_region
        %s281 = ssub.s32 %s13, 2
        // Predicated region
        $region37: #{tpu_custom_call.1} parent=35 // pred_check
          %p282 = pneg %p84
        $region38: #{tpu_custom_call.1} parent=35 // pred_check_branch
          %284 = sbr.rel (%p282) target = $region40
        $region39: #{tpu_custom_call.1} parent=35 // pred_region
          %s285 = sand.u32 %s69, 1
          %s286 = scalar_lea.sflag [#allocation4], %s285
          %s287 = sand.u32 %s69, 1
          %s288 = smul.addr %s287, 8
          %s289 = scalar_lea.vmem [#allocation5], %s288
          %290 = dma.done %s286, 128
        $region40: #{tpu_custom_call.1} parent=35 // pred_fallthru
          _
      $region36: #{tpu_custom_call.1} parent=5 // pred_fallthru
        _
    $region6: #{tpu_custom_call.1} parent=1 // loop_footer
      %s17 = sadd.s32 1, %s13
    $region7: #{tpu_custom_call.1} parent=1 // loop_footer_branch
      %12 = sbr.rel target = $region3
    $region8: #{tpu_custom_call.1} parent=1 // loop_exit
      _
    %291 = vsyncpa [#allocation3], 1
    %s292 = scalar_lea.sflag [#allocation3], 1
    %293 = vsyncpa %s292, 1
    %294 = vsyncpa [#allocation4], 1
    %s295 = scalar_lea.sflag [#allocation4], 1
    %296 = vsyncpa %s295, 1

</llo_original>
